<compile_context>
chip_gen: v5e
topology: v5e:2x2
jax: 0.10.0
libtpu: 0.0.40
codegen_flags: <defaults>
</compile_context>

<pallas_src>
import jax
import jax.numpy as jnp
from jax.experimental import pallas as pl
from jax.experimental.pallas import tpu as pltpu

_LANE = 128                       # lane-dense last dim
_SMALL_LIMIT_BYTES = 512 * 1024   # below this: single whole-array block


def _relu_kernel(x_ref, o_ref):
    x = x_ref[...]
    # dtype-matched zero (avoids promotion for bf16 / int dtypes).
    o_ref[...] = jnp.maximum(x, jnp.zeros((), x.dtype))


def _round_up(n, m):
    return ((n + m - 1) // m) * m


def _chip_params():
    """(target_block_bytes, tensorcores_per_device) with conservative defaults."""
    block_bytes, cores = 2 * 1024 * 1024, 1            # v5e-safe default
    try:
        kind = jax.devices()[0].device_kind.lower()
    except Exception:
        return block_bytes, cores
    if "v6" in kind:
        block_bytes, cores = 4 * 1024 * 1024, 1        # 16 MiB live < 32 MiB scoped
    elif "v7" in kind or "7x" in kind or "tpu7" in kind:
        block_bytes, cores = 6 * 1024 * 1024, 2        # 24 MiB live < 32 MiB scoped
    elif "v5" in kind:
        block_bytes, cores = 2 * 1024 * 1024, 1        # 8 MiB live < 16 MiB scoped
    return block_bytes, cores


def _plan_rows(rows, itemsize, pack, block_bytes, cores):
    """Pick (tile_rows, num_blocks) for a (rows, 128) lane-dense view."""
    row_bytes = _LANE * itemsize
    max_rows = max(pack, (block_bytes // row_bytes) // pack * pack)

    tile_rows = min(rows, max_rows)
    # Multi-TensorCore chips (v7x): split reasonably large inputs into a
    # balanced, core-count-multiple number of blocks so the "parallel" row
    # axis can be sharded across both cores.  Single-TC chips skip this.
    if cores > 1 and rows * row_bytes > 2 * 1024 * 1024:
        want_blocks = _round_up(max(cores, pl.cdiv(rows, tile_rows)), cores)
        tile_rows = _round_up(pl.cdiv(rows, want_blocks), pack)

    if tile_rows >= rows:
        return rows, 1                                  # single full-extent block
    tile_rows = max(pack, (tile_rows // pack) * pack)   # sublane-granular
    return tile_rows, pl.cdiv(rows, tile_rows)


def _relu_whole(x2d):
    # Whole array as one block in VMEM; full-extent blocks bypass the (8,128)
    # divisibility rule.  Used only for small inputs.
    return pl.pallas_call(
        _relu_kernel,
        out_shape=jax.ShapeDtypeStruct(x2d.shape, x2d.dtype),
    )(x2d)


def _relu_tiled(x2d, tile_rows, num_blocks, alias_input=False):
    kwargs = {}
    if alias_input:
        # Only used when x2d is a fresh temporary (pad fallback): copy-free.
        kwargs["input_output_aliases"] = {0: 0}
    return pl.pallas_call(
        _relu_kernel,
        out_shape=jax.ShapeDtypeStruct(x2d.shape, x2d.dtype),
        grid=(num_blocks,),
        in_specs=[pl.BlockSpec((tile_rows, _LANE), lambda i: (i, 0))],
        out_specs=pl.BlockSpec((tile_rows, _LANE), lambda i: (i, 0)),
        compiler_params=pltpu.CompilerParams(
            dimension_semantics=("parallel",),
        ),
        **kwargs,
    )(x2d)


def relu_pallas(x: jax.Array) -> jax.Array:
    """ReLU via Pallas TPU kernels. Any shape/dtype; returns same shape/dtype."""
    n = x.size
    if n == 0:
        return x

    itemsize = jnp.dtype(x.dtype).itemsize
    pack = max(8, 32 // max(1, itemsize))     # native sublane rows per dtype
    block_bytes, cores = _chip_params()

    # -------- main path: lane-dense (rows, 128) view, no pad, no slice -------
    if n % _LANE == 0:
        rows = n // _LANE
        x2d = x.reshape(rows, _LANE)          # contiguous flat view: free
        tile_rows, num_blocks = _plan_rows(rows, itemsize, pack, block_bytes, cores)
        return _relu_tiled(x2d, tile_rows, num_blocks).reshape(x.shape)

    # -------- small & ragged: single whole-array block ----------------------
    if n * itemsize <= _SMALL_LIMIT_BYTES:
        xin = x.reshape(1, n)                 # lane view, single full block
        return _relu_whole(xin).reshape(x.shape)

    # -------- rare fallback: large AND x.size % 128 != 0 ---------------------
    # TODO(synk): this path still pays a minimal pad (+ <512B of data) and a
    # trailing slice; a 1-D ragged grid or an in-kernel tail mask would remove
    # the extra HBM passes.  Real activation tensors almost never hit it.
    padded = _round_up(n, _LANE)
    x_flat = jnp.pad(x.reshape(-1), (0, padded - n))
    rows = padded // _LANE
    tile_rows, num_blocks = _plan_rows(rows, itemsize, pack, block_bytes, cores)
    out2d = _relu_tiled(x_flat.reshape(rows, _LANE), tile_rows, num_blocks,
                        alias_input=True)     # fresh temp -> alias is free
    return out2d.reshape(-1)[:n].reshape(x.shape)


if __name__ == "__main__":
    relu = jax.jit(relu_pallas)

    key = jax.random.PRNGKey(0)
    # NCHW input, small shapes: batch=2, channels=4, spatial=16x16
    x = jax.random.normal(key, (2, 4, 16, 16), dtype=jnp.float32)
    y = relu(x)
    jax.block_until_ready(y)
    assert y.shape == x.shape and y.dtype == x.dtype
    assert jnp.allclose(y, jnp.maximum(x, 0.0)), "ReLU mismatch (f32 main path)"

    # bf16 input exercises the dtype-aware (16,128) sublane granularity.
    x_bf = x.astype(jnp.bfloat16)
    y_bf = relu(x_bf)
    jax.block_until_ready(y_bf)
    assert y_bf.dtype == jnp.bfloat16
    assert jnp.allclose(y_bf.astype(jnp.float32),
                        jnp.maximum(x_bf, 0).astype(jnp.float32)), \
        "ReLU mismatch (bf16 path)"

    # Larger tensor: exercises the tiled (rows, 128) path (224000 % 128 == 0,
    # so no pad / no slice) with a ragged tail block.
    x_big = jax.random.normal(jax.random.PRNGKey(1), (5, 7, 64, 100),
                              dtype=jnp.float32)
    y_big = relu(x_big)
    jax.block_until_ready(y_big)
    assert jnp.allclose(y_big, jnp.maximum(x_big, 0.0)), \
        "ReLU mismatch (tiled path)"

    # Small ragged tensor (size not a multiple of 128): whole-array path.
    x_odd = jax.random.normal(jax.random.PRNGKey(2), (3, 5, 7), dtype=jnp.float32)
    y_odd = relu(x_odd)
    jax.block_until_ready(y_odd)
    assert jnp.allclose(y_odd, jnp.maximum(x_odd, 0.0)), \
        "ReLU mismatch (ragged small path)"

    print("KERNEL_OK")
</pallas_src>

<mosaic_0001>
module attributes {stable_mosaic.version = 11 : i64} {
  func.func @_relu_kernel(%arg0: i32, %arg1: memref<16x128xf32, #tpu.memory_space<vmem>>, %arg2: memref<16x128xf32, #tpu.memory_space<vmem>>) attributes {dimension_semantics = [#tpu.dimension_semantics<parallel>], iteration_bounds = array<i64: 1>, scalar_prefetch = 0 : i64, scratch_operands = 0 : i64, tpu.core_type = #tpu.core_type<tc>, window_params = [{transform_indices = @transform_0, window_bounds = array<i64: 16, 128>}, {transform_indices = @transform_1, window_bounds = array<i64: 16, 128>}]} {
    %c0 = arith.constant 0 : index
    %c0_0 = arith.constant 0 : index
    %0 = vector.load %arg1[%c0, %c0_0] : memref<16x128xf32, #tpu.memory_space<vmem>>, vector<16x128xf32>
    %cst = arith.constant 0.000000e+00 : f32
    %1 = vector.broadcast %cst : f32 to vector<16x128xf32>
    %2 = arith.maximumf %0, %1 : vector<16x128xf32>
    %c0_1 = arith.constant 0 : index
    %c0_2 = arith.constant 0 : index
    %3 = vector.load %arg2[%c0_1, %c0_2] : memref<16x128xf32, #tpu.memory_space<vmem>>, vector<16x128xf32>
    tpu.vector_store %arg2[%c0_1, %c0_2], %2 {strides = array<i32>} : memref<16x128xf32, #tpu.memory_space<vmem>>, vector<16x128xf32>,
    return
  }
  func.func @transform_0(%arg0: i32) -> (i32, i32) {
    %c0_i32 = arith.constant 0 : i32
    %c0_i32_0 = arith.constant 0 : i32
    return %arg0, %c0_i32 : i32, i32
  }
  func.func @transform_1(%arg0: i32) -> (i32, i32) {
    %c0_i32 = arith.constant 0 : i32
    %c0_i32_0 = arith.constant 0 : i32
    return %arg0, %c0_i32 : i32, i32
  }
}

</mosaic_0001>

<llo_original>
// kernel: relu_pallas.1
$region0: #{relu_pallas.1}
  #allocation0 [shape = 'u32[]', space=smem, size = 0x4, offset = 0x4, fixed_abs, tag = 'smem constant byte address 0x4 - core index']
  #allocation1 [shape = 'u32[72,128]{1,0:T(1,128)}', space=vmem, size = 0x9000, scoped, tag = 'internal scratch']
  %s0 = inlined_call_operand.vmem [shape: f32[16,128], index: 0, kind: input, shape index: {}]
  %s1 = inlined_call_operand.vmem [shape: f32[16,128], index: 1, kind: output, shape index: {}]
  %s2 = sld [smem:[#allocation0]]
  $region14: #{relu_pallas.1} parent=0
    _
  %s4 = ssub.s32 1, %s2
  %s5 = scalar_select 0, %s4, %s2
  // Predicated region
  $region2: #{relu_pallas.1} parent=0 // pred_check
    _
  $region3: #{relu_pallas.1} parent=0 // pred_check_branch
    %7 = sbr.rel (0) target = $region5
  $region4: #{relu_pallas.1} parent=0 // pred_region
    _
  $region5: #{relu_pallas.1} parent=0 // pred_fallthru
    _
  %v8 = vld [vmem:[%s0] sm:$0xff]
  %v9 = vld [vmem:[%s0 + $0x8] sm:$0xff]
  %v10 = vmax.f32 %v8, 0.0
  %v11 = vmax.f32 %v9, 0.0
  %12 = vst [vmem:[%s1] sm:$0xff] %v10
  %13 = vst [vmem:[%s1 + $0x8] sm:$0xff] %v11
  // Predicated region
  $region6: #{relu_pallas.1} parent=0 // pred_check
    _
  $region7: #{relu_pallas.1} parent=0 // pred_check_branch
    %15 = sbr.rel (0) target = $region9
  $region8: #{relu_pallas.1} parent=0 // pred_region
    _
  $region9: #{relu_pallas.1} parent=0 // pred_fallthru
    _
  // Predicated region
  $region10: #{relu_pallas.1} parent=0 // pred_check
    _
  $region11: #{relu_pallas.1} parent=0 // pred_check_branch
    %17 = sbr.rel (0) target = $region13
  $region12: #{relu_pallas.1} parent=0 // pred_region
    _
  $region13: #{relu_pallas.1} parent=0 // pred_fallthru
    _

</llo_original>
